<compile_context>
chip_gen: v6e
topology: v6e:2x2x1
jax: 0.10.0
libtpu: 0.0.40
codegen_flags: <defaults>
</compile_context>

<pallas_src>
import functools

import jax
import jax.numpy as jnp
from jax.experimental import pallas as pl
from jax.experimental.pallas import tpu as pltpu


def _round_up(x, m):
    return (x + m - 1) // m * m


def _ner_kernel(sent_ref, gaz_ref, pos_ref, word_ref,
                tf_ref, be_ref, wd_ref, bd_ref, out_ref, *, offsets):
    """Fused embedder + encoder (Linear+ReLU) + decoder (Linear) for one row block.

    sent/gaz/pos/word_ref: [SB, C] int32  raw per-table ids (offsets applied here)
    tf_ref : [C, Vp, Hp]  bf16  fused per-slot tables  T_c = concat_table @ w_enc[c]
    be_ref : [1, Hp]      f32   encoder bias (zero-padded)
    wd_ref : [Hp, Tp]     bf16  decoder weight (zero-padded)
    bd_ref : [1, Tp]      f32   decoder bias (zero-padded)
    out_ref: [SB, Tp]     f32   predicted tag scores (padded tag columns are 0)
    """
    SB = sent_ref.shape[0]
    C, Vp, _ = tf_ref.shape

    # Offset each id stream into its disjoint range of the concatenated table.
    ids = (sent_ref[...] + offsets[0],
           gaz_ref[...] + offsets[1],
           pos_ref[...] + offsets[2],
           word_ref[...] + offsets[3])                       # each [SB, C] int32

    iota = jax.lax.broadcasted_iota(jnp.int32, (SB, Vp), 1)

    # Encoder pre-activation:  sum_c  multihot_c @ T_c   (embedder folded in).
    acc = None
    for c in range(C):                                       # static, unrolled
        mh = None
        for t in ids:                                        # boolean OR == sum
            eq = iota == t[:, c:c + 1]                       # [SB, Vp] bool
            mh = eq if mh is None else (mh | eq)
        d = jnp.dot(mh.astype(jnp.bfloat16), tf_ref[c],
                    preferred_element_type=jnp.float32)      # [SB, Hp] f32
        acc = d if acc is None else acc + d

    # Bias + ReLU epilogue in f32 (v5e-safe).
    h = jnp.maximum(acc + be_ref[...], 0.0)

    # Decoder.
    out = jnp.dot(h.astype(jnp.bfloat16), wd_ref[...],
                  preferred_element_type=jnp.float32) + bd_ref[...]
    out_ref[...] = out.astype(out_ref.dtype)


def prepare_model(params, *, context_len):
    """One-time (model-load) packing: concat tables, fuse tbl@w_enc, pad, cast."""
    tables = [params["emb_sent"], params["emb_gazet"],
              params["emb_pos"], params["emb_word"]]
    sizes = [int(t.shape[0]) for t in tables]
    offsets = (0, sizes[0], sizes[0] + sizes[1], sizes[0] + sizes[1] + sizes[2])
    V = sum(sizes)
    E = int(tables[0].shape[1])
    H = int(params["w_enc"].shape[1])
    T = int(params["w_dec"].shape[1])

    Vp = _round_up(V, 256)     # MXU-native K (2x128 on v5e, 256 on v6e/v7x)
    Hp = _round_up(H, 128)
    Tp = _round_up(T, 128)     # dense 128-lane output stores

    tbl = jnp.concatenate(tables, axis=0)                               # [V, E]
    tbl = jnp.pad(tbl, ((0, Vp - V), (0, 0)))                           # zero rows
    we3 = params["w_enc"].reshape(context_len, E, H)
    we3 = jnp.pad(we3, ((0, 0), (0, 0), (0, Hp - H)))                   # [C, E, Hp]

    # Algebraic fusion (f32 at load time, then bf16 for the MXU).
    tfused = jnp.einsum("ve,ceh->cvh", tbl, we3).astype(jnp.bfloat16)   # [C, Vp, Hp]

    b_enc = jnp.pad(params["b_enc"].reshape(1, H).astype(jnp.float32),
                    ((0, 0), (0, Hp - H)))
    w_dec = jnp.pad(params["w_dec"], ((0, Hp - H), (0, Tp - T))).astype(jnp.bfloat16)
    b_dec = jnp.pad(params["b_dec"].reshape(1, T).astype(jnp.float32),
                    ((0, 0), (0, Tp - T)))

    model = {"tfused": tfused, "b_enc": b_enc, "w_dec": w_dec, "b_dec": b_dec}
    meta = {"offsets": offsets, "context_len": context_len, "n_tags": T}
    return model, meta


def make_ner_forward(meta, *, row_block=128):
    """Builds the jitted forward.  Static config (offsets, C, T) is closed over."""
    offsets = tuple(int(o) for o in meta["offsets"])
    C = int(meta["context_len"])
    T = int(meta["n_tags"])
    kernel = functools.partial(_ner_kernel, offsets=offsets)

    @jax.jit
    def forward(model, sentence, gazet, pos, words):
        S = sentence.shape[0]
        # Row-block the token axis: batched-sentence calls get 128-token blocks on
        # a "parallel" grid axis (v7x: split across the 2 TCs); S=8 => one block.
        SB = row_block if S >= row_block else _round_up(max(S, 8), 8)
        S_pad = _round_up(S, SB)

        sentence = sentence.astype(jnp.int32)
        gazet = gazet.astype(jnp.int32)
        pos = pos.astype(jnp.int32)
        words = words.astype(jnp.int32)
        if S_pad != S:
            padc = ((0, S_pad - S), (0, 0))
            sentence = jnp.pad(sentence, padc)
            gazet = jnp.pad(gazet, padc)
            pos = jnp.pad(pos, padc)
            words = jnp.pad(words, padc)

        tf = model["tfused"]
        Cc, Vp, Hp = tf.shape
        Tp = model["w_dec"].shape[1]

        ids_spec = pl.BlockSpec((SB, C), lambda i: (i, 0))
        out = pl.pallas_call(
            kernel,
            out_shape=jax.ShapeDtypeStruct((S_pad, Tp), jnp.float32),
            grid_spec=pltpu.PrefetchScalarGridSpec(
                num_scalar_prefetch=0,
                grid=(S_pad // SB,),
                in_specs=[ids_spec, ids_spec, ids_spec, ids_spec,
                          pl.BlockSpec((Cc, Vp, Hp), lambda i: (0, 0, 0)),
                          pl.BlockSpec((1, Hp), lambda i: (0, 0)),
                          pl.BlockSpec((Hp, Tp), lambda i: (0, 0)),
                          pl.BlockSpec((1, Tp), lambda i: (0, 0))],
                out_specs=pl.BlockSpec((SB, Tp), lambda i: (i, 0)),
            ),
            compiler_params=pltpu.CompilerParams(
                dimension_semantics=("parallel",)),
        )(sentence, gazet, pos, words,
          tf, model["b_enc"], model["w_dec"], model["b_dec"])

        # Lazy un-pad outside the kernel (keeps in-kernel stores lane-dense).
        return out[:S, :T]

    return forward


def init_params(key, *, vocab=64, n_gazet=16, n_pos=12, n_words=64,
                embed_dim=32, context_len=5, hidden_dim=64, n_tags=16):
    ks = jax.random.split(key, 8)
    s = 0.1
    return {
        "emb_sent":  s * jax.random.normal(ks[0], (vocab,   embed_dim), jnp.float32),
        "emb_gazet": s * jax.random.normal(ks[1], (n_gazet, embed_dim), jnp.float32),
        "emb_pos":   s * jax.random.normal(ks[2], (n_pos,   embed_dim), jnp.float32),
        "emb_word":  s * jax.random.normal(ks[3], (n_words, embed_dim), jnp.float32),
        "w_enc": s * jax.random.normal(ks[4], (context_len * embed_dim, hidden_dim), jnp.float32),
        "b_enc": s * jax.random.normal(ks[5], (1, hidden_dim), jnp.float32),
        "w_dec": s * jax.random.normal(ks[6], (hidden_dim, n_tags), jnp.float32),
        "b_dec": s * jax.random.normal(ks[7], (1, n_tags), jnp.float32),
    }


if __name__ == "__main__":
    key = jax.random.PRNGKey(0)
    S, C = 8, 5                       # sentence_len, context_len
    vocab, n_gazet, n_pos, n_words = 64, 16, 12, 64
    E, H, T = 32, 64, 16

    params = init_params(key, vocab=vocab, n_gazet=n_gazet, n_pos=n_pos,
                         n_words=n_words, embed_dim=E, context_len=C,
                         hidden_dim=H, n_tags=T)

    # Load-time packing (done once), then a per-call jitted forward.
    model, meta = prepare_model(params, context_len=C)
    ner_forward = make_ner_forward(meta)

    k1, k2, k3, k4 = jax.random.split(jax.random.PRNGKey(0), 4)
    sentence = jax.random.randint(k1, (S, C), 0, vocab,   dtype=jnp.int32)
    gazet    = jax.random.randint(k2, (S, C), 0, n_gazet, dtype=jnp.int32)
    pos      = jax.random.randint(k3, (S, C), 0, n_pos,   dtype=jnp.int32)
    words    = jax.random.randint(k4, (S, C), 0, n_words, dtype=jnp.int32)

    tags = ner_forward(model, sentence, gazet, pos, words)
    jax.block_until_ready(tags)
    assert tags.shape == (S, T)

    # --- Reference 1: mirrors the kernel's fused-bf16 numerics exactly ------------
    offs = meta["offsets"]
    tf32 = model["tfused"].astype(jnp.float32)                     # [C, Vp, Hp]
    gids = jnp.stack([sentence + offs[0], gazet + offs[1],
                      pos + offs[2], words + offs[3]], axis=-1)    # [S, C, 4]
    pre = jnp.zeros((S, tf32.shape[2]), jnp.float32)
    for c in range(C):
        for j in range(4):
            pre = pre + tf32[c][gids[:, c, j]]
    h_m = jnp.maximum(pre + model["b_enc"], 0.0)
    ref_mirror = (h_m.astype(jnp.bfloat16).astype(jnp.float32)
                  @ model["w_dec"].astype(jnp.float32)) + model["b_dec"]
    ref_mirror = ref_mirror[:, :T]
    assert jnp.allclose(tags, ref_mirror, atol=1e-4, rtol=1e-3), \
        float(jnp.max(jnp.abs(tags - ref_mirror)))

    # --- Reference 2: full-f32 semantics of the original PyTorch module -----------
    emb = (params["emb_sent"][sentence] + params["emb_gazet"][gazet]
           + params["emb_pos"][pos] + params["emb_word"][words])   # [S, C, E]
    x = emb.reshape(S, C * E)
    h_ref = jnp.maximum(x @ params["w_enc"] + params["b_enc"], 0.0)
    ref_f32 = h_ref @ params["w_dec"] + params["b_dec"]
    assert jnp.allclose(tags, ref_f32, atol=5e-2, rtol=5e-2), \
        float(jnp.max(jnp.abs(tags - ref_f32)))

    print("KERNEL_OK")
</pallas_src>

<mosaic_0001>
module attributes {stable_mosaic.version = 11 : i64} {
  func.func @_ner_kernel(%arg0: i32, %arg1: memref<8x5xi32, #tpu.memory_space<vmem>>, %arg2: memref<8x5xi32, #tpu.memory_space<vmem>>, %arg3: memref<8x5xi32, #tpu.memory_space<vmem>>, %arg4: memref<8x5xi32, #tpu.memory_space<vmem>>, %arg5: memref<5x256x128xbf16, #tpu.memory_space<vmem>>, %arg6: memref<1x128xf32, #tpu.memory_space<vmem>>, %arg7: memref<128x128xbf16, #tpu.memory_space<vmem>>, %arg8: memref<1x128xf32, #tpu.memory_space<vmem>>, %arg9: memref<8x128xf32, #tpu.memory_space<vmem>>) attributes {dimension_semantics = [#tpu.dimension_semantics<parallel>], iteration_bounds = array<i64: 1>, scalar_prefetch = 0 : i64, scratch_operands = 0 : i64, tpu.core_type = #tpu.core_type<tc>, window_params = [{transform_indices = @transform_0, window_bounds = array<i64: 8, 5>}, {transform_indices = @transform_1, window_bounds = array<i64: 8, 5>}, {transform_indices = @transform_2, window_bounds = array<i64: 8, 5>}, {transform_indices = @transform_3, window_bounds = array<i64: 8, 5>}, {pipeline_mode = #tpu.pipeline_mode<synchronous>, transform_indices = @transform_4, window_bounds = array<i64: 5, 256, 128>}, {pipeline_mode = #tpu.pipeline_mode<synchronous>, transform_indices = @transform_5, window_bounds = array<i64: 1, 128>}, {pipeline_mode = #tpu.pipeline_mode<synchronous>, transform_indices = @transform_6, window_bounds = array<i64: 128, 128>}, {pipeline_mode = #tpu.pipeline_mode<synchronous>, transform_indices = @transform_7, window_bounds = array<i64: 1, 128>}, {transform_indices = @transform_8, window_bounds = array<i64: 8, 128>}]} {
    %c0 = arith.constant 0 : index
    %c0_0 = arith.constant 0 : index
    %0 = vector.load %arg1[%c0, %c0_0] : memref<8x5xi32, #tpu.memory_space<vmem>>, vector<8x5xi32>
    %c0_i32 = arith.constant 0 : i32
    %1 = vector.broadcast %c0_i32 : i32 to vector<8x5xi32>
    %2 = arith.addi %0, %1 : vector<8x5xi32>
    %c0_1 = arith.constant 0 : index
    %c0_2 = arith.constant 0 : index
    %3 = vector.load %arg2[%c0_1, %c0_2] : memref<8x5xi32, #tpu.memory_space<vmem>>, vector<8x5xi32>
    %c64_i32 = arith.constant 64 : i32
    %4 = vector.broadcast %c64_i32 : i32 to vector<8x5xi32>
    %5 = arith.addi %3, %4 : vector<8x5xi32>
    %c0_3 = arith.constant 0 : index
    %c0_4 = arith.constant 0 : index
    %6 = vector.load %arg3[%c0_3, %c0_4] : memref<8x5xi32, #tpu.memory_space<vmem>>, vector<8x5xi32>
    %c80_i32 = arith.constant 80 : i32
    %7 = vector.broadcast %c80_i32 : i32 to vector<8x5xi32>
    %8 = arith.addi %6, %7 : vector<8x5xi32>
    %c0_5 = arith.constant 0 : index
    %c0_6 = arith.constant 0 : index
    %9 = vector.load %arg4[%c0_5, %c0_6] : memref<8x5xi32, #tpu.memory_space<vmem>>, vector<8x5xi32>
    %c92_i32 = arith.constant 92 : i32
    %10 = vector.broadcast %c92_i32 : i32 to vector<8x5xi32>
    %11 = arith.addi %9, %10 : vector<8x5xi32>
    %12 = tpu.iota {dimensions = array<i32: 1>} : vector<8x256xi32>
    %13 = vector.extract_strided_slice %2 {offsets = [0, 0], sizes = [8, 1], strides = [1, 1]} : vector<8x5xi32> to vector<8x1xi32>
    %14 = vector.broadcast %13 : vector<8x1xi32> to vector<8x256xi32>
    %15 = arith.cmpi eq, %12, %14 : vector<8x256xi32>
    %16 = vector.extract_strided_slice %5 {offsets = [0, 0], sizes = [8, 1], strides = [1, 1]} : vector<8x5xi32> to vector<8x1xi32>
    %17 = vector.broadcast %16 : vector<8x1xi32> to vector<8x256xi32>
    %18 = arith.cmpi eq, %12, %17 : vector<8x256xi32>
    %19 = arith.ori %15, %18 : vector<8x256xi1>
    %20 = vector.extract_strided_slice %8 {offsets = [0, 0], sizes = [8, 1], strides = [1, 1]} : vector<8x5xi32> to vector<8x1xi32>
    %21 = vector.broadcast %20 : vector<8x1xi32> to vector<8x256xi32>
    %22 = arith.cmpi eq, %12, %21 : vector<8x256xi32>
    %23 = arith.ori %19, %22 : vector<8x256xi1>
    %24 = vector.extract_strided_slice %11 {offsets = [0, 0], sizes = [8, 1], strides = [1, 1]} : vector<8x5xi32> to vector<8x1xi32>
    %25 = vector.broadcast %24 : vector<8x1xi32> to vector<8x256xi32>
    %26 = arith.cmpi eq, %12, %25 : vector<8x256xi32>
    %27 = arith.ori %23, %26 : vector<8x256xi1>
    %28 = arith.extui %27 : vector<8x256xi1> to vector<8x256xi32>
    %29 = arith.sitofp %28 : vector<8x256xi32> to vector<8x256xf32>
    %30 = arith.truncf %29 : vector<8x256xf32> to vector<8x256xbf16>
    %c0_7 = arith.constant 0 : index
    %c0_8 = arith.constant 0 : index
    %c0_9 = arith.constant 0 : index
    %31 = vector.load %arg5[%c0_7, %c0_8, %c0_9] : memref<5x256x128xbf16, #tpu.memory_space<vmem>>, vector<1x256x128xbf16>
    %32 = vector.shape_cast %31 : vector<1x256x128xbf16> to vector<256x128xbf16>
    %cst = arith.constant dense<0.000000e+00> : vector<8x128xf32>
    %33 = tpu.matmul %30, %32, %cst {dimension_numbers = #tpu.dot_dimension_numbers<[1], [0], [0], [1], [0, 0, 1, 1], [], []>} : vector<8x256xbf16>, vector<256x128xbf16>, vector<8x128xf32> -> vector<8x128xf32>
    %34 = vector.extract_strided_slice %2 {offsets = [0, 1], sizes = [8, 1], strides = [1, 1]} : vector<8x5xi32> to vector<8x1xi32>
    %35 = vector.broadcast %34 : vector<8x1xi32> to vector<8x256xi32>
    %36 = arith.cmpi eq, %12, %35 : vector<8x256xi32>
    %37 = vector.extract_strided_slice %5 {offsets = [0, 1], sizes = [8, 1], strides = [1, 1]} : vector<8x5xi32> to vector<8x1xi32>
    %38 = vector.broadcast %37 : vector<8x1xi32> to vector<8x256xi32>
    %39 = arith.cmpi eq, %12, %38 : vector<8x256xi32>
    %40 = arith.ori %36, %39 : vector<8x256xi1>
    %41 = vector.extract_strided_slice %8 {offsets = [0, 1], sizes = [8, 1], strides = [1, 1]} : vector<8x5xi32> to vector<8x1xi32>
    %42 = vector.broadcast %41 : vector<8x1xi32> to vector<8x256xi32>
    %43 = arith.cmpi eq, %12, %42 : vector<8x256xi32>
    %44 = arith.ori %40, %43 : vector<8x256xi1>
    %45 = vector.extract_strided_slice %11 {offsets = [0, 1], sizes = [8, 1], strides = [1, 1]} : vector<8x5xi32> to vector<8x1xi32>
    %46 = vector.broadcast %45 : vector<8x1xi32> to vector<8x256xi32>
    %47 = arith.cmpi eq, %12, %46 : vector<8x256xi32>
    %48 = arith.ori %44, %47 : vector<8x256xi1>
    %49 = arith.extui %48 : vector<8x256xi1> to vector<8x256xi32>
    %50 = arith.sitofp %49 : vector<8x256xi32> to vector<8x256xf32>
    %51 = arith.truncf %50 : vector<8x256xf32> to vector<8x256xbf16>
    %c1 = arith.constant 1 : index
    %c0_10 = arith.constant 0 : index
    %c0_11 = arith.constant 0 : index
    %52 = vector.load %arg5[%c1, %c0_10, %c0_11] : memref<5x256x128xbf16, #tpu.memory_space<vmem>>, vector<1x256x128xbf16>
    %53 = vector.shape_cast %52 : vector<1x256x128xbf16> to vector<256x128xbf16>
    %cst_12 = arith.constant dense<0.000000e+00> : vector<8x128xf32>
    %54 = tpu.matmul %51, %53, %cst_12 {dimension_numbers = #tpu.dot_dimension_numbers<[1], [0], [0], [1], [0, 0, 1, 1], [], []>} : vector<8x256xbf16>, vector<256x128xbf16>, vector<8x128xf32> -> vector<8x128xf32>
    %55 = arith.addf %33, %54 : vector<8x128xf32>
    %56 = vector.extract_strided_slice %2 {offsets = [0, 2], sizes = [8, 1], strides = [1, 1]} : vector<8x5xi32> to vector<8x1xi32>
    %57 = vector.broadcast %56 : vector<8x1xi32> to vector<8x256xi32>
    %58 = arith.cmpi eq, %12, %57 : vector<8x256xi32>
    %59 = vector.extract_strided_slice %5 {offsets = [0, 2], sizes = [8, 1], strides = [1, 1]} : vector<8x5xi32> to vector<8x1xi32>
    %60 = vector.broadcast %59 : vector<8x1xi32> to vector<8x256xi32>
    %61 = arith.cmpi eq, %12, %60 : vector<8x256xi32>
    %62 = arith.ori %58, %61 : vector<8x256xi1>
    %63 = vector.extract_strided_slice %8 {offsets = [0, 2], sizes = [8, 1], strides = [1, 1]} : vector<8x5xi32> to vector<8x1xi32>
    %64 = vector.broadcast %63 : vector<8x1xi32> to vector<8x256xi32>
    %65 = arith.cmpi eq, %12, %64 : vector<8x256xi32>
    %66 = arith.ori %62, %65 : vector<8x256xi1>
    %67 = vector.extract_strided_slice %11 {offsets = [0, 2], sizes = [8, 1], strides = [1, 1]} : vector<8x5xi32> to vector<8x1xi32>
    %68 = vector.broadcast %67 : vector<8x1xi32> to vector<8x256xi32>
    %69 = arith.cmpi eq, %12, %68 : vector<8x256xi32>
    %70 = arith.ori %66, %69 : vector<8x256xi1>
    %71 = arith.extui %70 : vector<8x256xi1> to vector<8x256xi32>
    %72 = arith.sitofp %71 : vector<8x256xi32> to vector<8x256xf32>
    %73 = arith.truncf %72 : vector<8x256xf32> to vector<8x256xbf16>
    %c2 = arith.constant 2 : index
    %c0_13 = arith.constant 0 : index
    %c0_14 = arith.constant 0 : index
    %74 = vector.load %arg5[%c2, %c0_13, %c0_14] : memref<5x256x128xbf16, #tpu.memory_space<vmem>>, vector<1x256x128xbf16>
    %75 = vector.shape_cast %74 : vector<1x256x128xbf16> to vector<256x128xbf16>
    %cst_15 = arith.constant dense<0.000000e+00> : vector<8x128xf32>
    %76 = tpu.matmul %73, %75, %cst_15 {dimension_numbers = #tpu.dot_dimension_numbers<[1], [0], [0], [1], [0, 0, 1, 1], [], []>} : vector<8x256xbf16>, vector<256x128xbf16>, vector<8x128xf32> -> vector<8x128xf32>
    %77 = arith.addf %55, %76 : vector<8x128xf32>
    %78 = vector.extract_strided_slice %2 {offsets = [0, 3], sizes = [8, 1], strides = [1, 1]} : vector<8x5xi32> to vector<8x1xi32>
    %79 = vector.broadcast %78 : vector<8x1xi32> to vector<8x256xi32>
    %80 = arith.cmpi eq, %12, %79 : vector<8x256xi32>
    %81 = vector.extract_strided_slice %5 {offsets = [0, 3], sizes = [8, 1], strides = [1, 1]} : vector<8x5xi32> to vector<8x1xi32>
    %82 = vector.broadcast %81 : vector<8x1xi32> to vector<8x256xi32>
    %83 = arith.cmpi eq, %12, %82 : vector<8x256xi32>
    %84 = arith.ori %80, %83 : vector<8x256xi1>
    %85 = vector.extract_strided_slice %8 {offsets = [0, 3], sizes = [8, 1], strides = [1, 1]} : vector<8x5xi32> to vector<8x1xi32>
    %86 = vector.broadcast %85 : vector<8x1xi32> to vector<8x256xi32>
    %87 = arith.cmpi eq, %12, %86 : vector<8x256xi32>
    %88 = arith.ori %84, %87 : vector<8x256xi1>
    %89 = vector.extract_strided_slice %11 {offsets = [0, 3], sizes = [8, 1], strides = [1, 1]} : vector<8x5xi32> to vector<8x1xi32>
    %90 = vector.broadcast %89 : vector<8x1xi32> to vector<8x256xi32>
    %91 = arith.cmpi eq, %12, %90 : vector<8x256xi32>
    %92 = arith.ori %88, %91 : vector<8x256xi1>
    %93 = arith.extui %92 : vector<8x256xi1> to vector<8x256xi32>
    %94 = arith.sitofp %93 : vector<8x256xi32> to vector<8x256xf32>
    %95 = arith.truncf %94 : vector<8x256xf32> to vector<8x256xbf16>
    %c3 = arith.constant 3 : index
    %c0_16 = arith.constant 0 : index
    %c0_17 = arith.constant 0 : index
    %96 = vector.load %arg5[%c3, %c0_16, %c0_17] : memref<5x256x128xbf16, #tpu.memory_space<vmem>>, vector<1x256x128xbf16>
    %97 = vector.shape_cast %96 : vector<1x256x128xbf16> to vector<256x128xbf16>
    %cst_18 = arith.constant dense<0.000000e+00> : vector<8x128xf32>
    %98 = tpu.matmul %95, %97, %cst_18 {dimension_numbers = #tpu.dot_dimension_numbers<[1], [0], [0], [1], [0, 0, 1, 1], [], []>} : vector<8x256xbf16>, vector<256x128xbf16>, vector<8x128xf32> -> vector<8x128xf32>
    %99 = arith.addf %77, %98 : vector<8x128xf32>
    %100 = vector.extract_strided_slice %2 {offsets = [0, 4], sizes = [8, 1], strides = [1, 1]} : vector<8x5xi32> to vector<8x1xi32>
    %101 = vector.broadcast %100 : vector<8x1xi32> to vector<8x256xi32>
    %102 = arith.cmpi eq, %12, %101 : vector<8x256xi32>
    %103 = vector.extract_strided_slice %5 {offsets = [0, 4], sizes = [8, 1], strides = [1, 1]} : vector<8x5xi32> to vector<8x1xi32>
    %104 = vector.broadcast %103 : vector<8x1xi32> to vector<8x256xi32>
    %105 = arith.cmpi eq, %12, %104 : vector<8x256xi32>
    %106 = arith.ori %102, %105 : vector<8x256xi1>
    %107 = vector.extract_strided_slice %8 {offsets = [0, 4], sizes = [8, 1], strides = [1, 1]} : vector<8x5xi32> to vector<8x1xi32>
    %108 = vector.broadcast %107 : vector<8x1xi32> to vector<8x256xi32>
    %109 = arith.cmpi eq, %12, %108 : vector<8x256xi32>
    %110 = arith.ori %106, %109 : vector<8x256xi1>
    %111 = vector.extract_strided_slice %11 {offsets = [0, 4], sizes = [8, 1], strides = [1, 1]} : vector<8x5xi32> to vector<8x1xi32>
    %112 = vector.broadcast %111 : vector<8x1xi32> to vector<8x256xi32>
    %113 = arith.cmpi eq, %12, %112 : vector<8x256xi32>
    %114 = arith.ori %110, %113 : vector<8x256xi1>
    %115 = arith.extui %114 : vector<8x256xi1> to vector<8x256xi32>
    %116 = arith.sitofp %115 : vector<8x256xi32> to vector<8x256xf32>
    %117 = arith.truncf %116 : vector<8x256xf32> to vector<8x256xbf16>
    %c4 = arith.constant 4 : index
    %c0_19 = arith.constant 0 : index
    %c0_20 = arith.constant 0 : index
    %118 = vector.load %arg5[%c4, %c0_19, %c0_20] : memref<5x256x128xbf16, #tpu.memory_space<vmem>>, vector<1x256x128xbf16>
    %119 = vector.shape_cast %118 : vector<1x256x128xbf16> to vector<256x128xbf16>
    %cst_21 = arith.constant dense<0.000000e+00> : vector<8x128xf32>
    %120 = tpu.matmul %117, %119, %cst_21 {dimension_numbers = #tpu.dot_dimension_numbers<[1], [0], [0], [1], [0, 0, 1, 1], [], []>} : vector<8x256xbf16>, vector<256x128xbf16>, vector<8x128xf32> -> vector<8x128xf32>
    %121 = arith.addf %99, %120 : vector<8x128xf32>
    %c0_22 = arith.constant 0 : index
    %c0_23 = arith.constant 0 : index
    %122 = vector.load %arg6[%c0_22, %c0_23] : memref<1x128xf32, #tpu.memory_space<vmem>>, vector<1x128xf32>
    %123 = vector.broadcast %122 : vector<1x128xf32> to vector<8x128xf32>
    %124 = arith.addf %121, %123 : vector<8x128xf32>
    %cst_24 = arith.constant 0.000000e+00 : f32
    %125 = vector.broadcast %cst_24 : f32 to vector<8x128xf32>
    %126 = arith.maximumf %124, %125 : vector<8x128xf32>
    %127 = arith.truncf %126 : vector<8x128xf32> to vector<8x128xbf16>
    %c0_25 = arith.constant 0 : index
    %c0_26 = arith.constant 0 : index
    %128 = vector.load %arg7[%c0_25, %c0_26] : memref<128x128xbf16, #tpu.memory_space<vmem>>, vector<128x128xbf16>
    %cst_27 = arith.constant dense<0.000000e+00> : vector<8x128xf32>
    %129 = tpu.matmul %127, %128, %cst_27 {dimension_numbers = #tpu.dot_dimension_numbers<[1], [0], [0], [1], [0, 0, 1, 1], [], []>} : vector<8x128xbf16>, vector<128x128xbf16>, vector<8x128xf32> -> vector<8x128xf32>
    %c0_28 = arith.constant 0 : index
    %c0_29 = arith.constant 0 : index
    %130 = vector.load %arg8[%c0_28, %c0_29] : memref<1x128xf32, #tpu.memory_space<vmem>>, vector<1x128xf32>
    %131 = vector.broadcast %130 : vector<1x128xf32> to vector<8x128xf32>
    %132 = arith.addf %129, %131 : vector<8x128xf32>
    %c0_30 = arith.constant 0 : index
    %c0_31 = arith.constant 0 : index
    %133 = vector.load %arg9[%c0_30, %c0_31] : memref<8x128xf32, #tpu.memory_space<vmem>>, vector<8x128xf32>
    tpu.vector_store %arg9[%c0_30, %c0_31], %132 {strides = array<i32>} : memref<8x128xf32, #tpu.memory_space<vmem>>, vector<8x128xf32>,
    return
  }
  func.func @transform_0(%arg0: i32) -> (i32, i32) {
    %c0_i32 = arith.constant 0 : i32
    %c0_i32_0 = arith.constant 0 : i32
    return %arg0, %c0_i32 : i32, i32
  }
  func.func @transform_1(%arg0: i32) -> (i32, i32) {
    %c0_i32 = arith.constant 0 : i32
    %c0_i32_0 = arith.constant 0 : i32
    return %arg0, %c0_i32 : i32, i32
  }
  func.func @transform_2(%arg0: i32) -> (i32, i32) {
    %c0_i32 = arith.constant 0 : i32
    %c0_i32_0 = arith.constant 0 : i32
    return %arg0, %c0_i32 : i32, i32
  }
  func.func @transform_3(%arg0: i32) -> (i32, i32) {
    %c0_i32 = arith.constant 0 : i32
    %c0_i32_0 = arith.constant 0 : i32
    return %arg0, %c0_i32 : i32, i32
  }
  func.func @transform_4(%arg0: i32) -> (i32, i32, i32) {
    %c0_i32 = arith.constant 0 : i32
    %c0_i32_0 = arith.constant 0 : i32
    %c0_i32_1 = arith.constant 0 : i32
    %c0_i32_2 = arith.constant 0 : i32
    return %c0_i32, %c0_i32_0, %c0_i32_1 : i32, i32, i32
  }
  func.func @transform_5(%arg0: i32) -> (i32, i32) {
    %c0_i32 = arith.constant 0 : i32
    %c0_i32_0 = arith.constant 0 : i32
    %c0_i32_1 = arith.constant 0 : i32
    return %c0_i32, %c0_i32_0 : i32, i32
  }
  func.func @transform_6(%arg0: i32) -> (i32, i32) {
    %c0_i32 = arith.constant 0 : i32
    %c0_i32_0 = arith.constant 0 : i32
    %c0_i32_1 = arith.constant 0 : i32
    return %c0_i32, %c0_i32_0 : i32, i32
  }
  func.func @transform_7(%arg0: i32) -> (i32, i32) {
    %c0_i32 = arith.constant 0 : i32
    %c0_i32_0 = arith.constant 0 : i32
    %c0_i32_1 = arith.constant 0 : i32
    return %c0_i32, %c0_i32_0 : i32, i32
  }
  func.func @transform_8(%arg0: i32) -> (i32, i32) {
    %c0_i32 = arith.constant 0 : i32
    %c0_i32_0 = arith.constant 0 : i32
    return %arg0, %c0_i32 : i32, i32
  }
}

</mosaic_0001>

<llo_original>
// kernel: forward.1
$region0: #{forward.1}
  #allocation0 [shape = 'u32[]', space=smem, size = 0x4, offset = 0x4, fixed_abs, tag = 'smem constant byte address 0x4 - core index']
  #allocation1 [shape = 'u32[144,128]{1,0:T(1,128)}', space=vmem, size = 0x12000, scoped, tag = 'internal scratch']
  %s0 = inlined_call_operand.hbm [shape: s32[8,5], index: 0, kind: input, shape index: {}]
  %s1 = inlined_call_operand.vmem [shape: s32[8,5], index: 1, kind: input, shape index: {}]
  %s2 = inlined_call_operand.hbm [shape: s32[8,5], index: 2, kind: input, shape index: {}]
  %s3 = inlined_call_operand.hbm [shape: s32[8,5], index: 3, kind: input, shape index: {}]
  %s4 = inlined_call_operand.hbm [shape: bf16[5,256,128], index: 4, kind: input, shape index: {}]
  %s5 = inlined_call_operand.vmem [shape: f32[1,128], index: 5, kind: input, shape index: {}]
  %s6 = inlined_call_operand.hbm [shape: bf16[128,128], index: 6, kind: input, shape index: {}]
  %s7 = inlined_call_operand.hbm [shape: f32[1,128], index: 7, kind: input, shape index: {}]
  %s8 = inlined_call_operand.hbm [shape: f32[8,128], index: 8, kind: output, shape index: {}]
  %s9 = sld [smem:[#allocation0]]
  $region66: #{forward.1} parent=0
    _
  %s11 = ssub.s32 1, %s9
  %s12 = scalar_select 0, %s11, %s9
  $region1: #{forward.1} parent=0
    #allocation2 [shape = 'u8[4096]{0}', space=vmem, size = 0x1000, scoped, tag = 'input window, operand 0, single buffered']
    #allocation3 [shape = 's32[1]{0}', space=sflag, size = 0x4, scoped, tag = 'scoped memory for forward.1']
    #allocation4 [shape = 's32[1]{0}', space=sflag, size = 0x4, scoped, tag = 'scoped memory for forward.1']
    #allocation5 [shape = 'u8[4096]{0}', space=vmem, size = 0x1000, scoped, tag = 'input window, operand 2, single buffered']
    #allocation6 [shape = 's32[1]{0}', space=sflag, size = 0x4, scoped, tag = 'scoped memory for forward.1']
    #allocation7 [shape = 'u8[4096]{0}', space=vmem, size = 0x1000, scoped, tag = 'input window, operand 3, single buffered']
    #allocation8 [shape = 'u8[327680]{0}', space=vmem, size = 0x50000, scoped, tag = 'input window, operand 4, single buffered']
    #allocation9 [shape = 's32[1]{0}', space=sflag, size = 0x4, scoped, tag = 'scoped memory for forward.1']
    #allocation10 [shape = 'u8[32768]{0}', space=vmem, size = 0x8000, scoped, tag = 'input window, operand 6, single buffered']
    #allocation11 [shape = 'u8[512]{0}', space=vmem, size = 0x400, scoped, tag = 'input window, operand 7, single buffered']
    #allocation12 [shape = 's32[1]{0}', space=sflag, size = 0x4, scoped, tag = 'scoped memory for forward.1']
    #allocation13 [shape = 'u8[4096]{0}', space=vmem, size = 0x1000, scoped, tag = 'output window, operand 0, single buffered']
    %13 = vsyncpa [#allocation3], 0
    %14 = vsyncpa [#allocation6], 0
    %15 = vsyncpa [#allocation9], 0
    %16 = vsyncpa [#allocation12], 0
    %17 = vsyncpa [#allocation4], 0
    // Predicated region
    $region2: #{forward.1} parent=1 // pred_check
      _
    $region3: #{forward.1} parent=1 // pred_check_branch
      %19 = sbr.rel (0) target = $region5
    $region4: #{forward.1} parent=1 // pred_region
      %s21 = ssub.s32 128, 128
      %22 = vsyncadd [#allocation3], %s21
      %s24 = sshll.u32 [#allocation2], 4
      %s25 = int_to_ptr.vmem [resolvable:$true] %s24
      %27 = dma.hbm_to_vmem [thread:$0]  %s0, 128, %s25, [#allocation3]
    $region5: #{forward.1} parent=1 // pred_fallthru
      _
    // Predicated region
    $region6: #{forward.1} parent=1 // pred_check
      _
    $region7: #{forward.1} parent=1 // pred_check_branch
      %29 = sbr.rel (0) target = $region9
    $region8: #{forward.1} parent=1 // pred_region
      _
    $region9: #{forward.1} parent=1 // pred_fallthru
      _
    // Predicated region
    $region10: #{forward.1} parent=1 // pred_check
      _
    $region11: #{forward.1} parent=1 // pred_check_branch
      %31 = sbr.rel (0) target = $region13
    $region12: #{forward.1} parent=1 // pred_region
      %s33 = ssub.s32 128, 128
      %34 = vsyncadd [#allocation6], %s33
      %s36 = sshll.u32 [#allocation5], 4
      %s37 = int_to_ptr.vmem [resolvable:$true] %s36
      %39 = dma.hbm_to_vmem [thread:$0]  %s2, 128, %s37, [#allocation6]
    $region13: #{forward.1} parent=1 // pred_fallthru
      _
    // Predicated region
    $region14: #{forward.1} parent=1 // pred_check
      _
    $region15: #{forward.1} parent=1 // pred_check_branch
      %41 = sbr.rel (0) target = $region17
    $region16: #{forward.1} parent=1 // pred_region
      %s43 = ssub.s32 128, 128
      %44 = vsyncadd [#allocation6], %s43
      %s46 = sshll.u32 [#allocation7], 4
      %s47 = int_to_ptr.vmem [resolvable:$true] %s46
      %49 = dma.hbm_to_vmem [thread:$0]  %s3, 128, %s47, [#allocation6]
    $region17: #{forward.1} parent=1 // pred_fallthru
      _
    // Predicated region
    $region18: #{forward.1} parent=1 // pred_check
      _
    $region19: #{forward.1} parent=1 // pred_check_branch
      %51 = sbr.rel (0) target = $region21
    $region20: #{forward.1} parent=1 // pred_region
      %s53 = ssub.s32 10240, 10240
      %54 = vsyncadd [#allocation9], %s53
      %s55 = sshll.u32 [#allocation8], 4
      %s56 = int_to_ptr.vmem [resolvable:$true] %s55
      %61 = dma.hbm_to_vmem [thread:$0]  %s4, 10240, %s56, [#allocation9], 64, 64, 4
    $region21: #{forward.1} parent=1 // pred_fallthru
      _
    // Predicated region
    $region22: #{forward.1} parent=1 // pred_check
      _
    $region23: #{forward.1} parent=1 // pred_check_branch
      %63 = sbr.rel (0) target = $region25
    $region24: #{forward.1} parent=1 // pred_region
      _
    $region25: #{forward.1} parent=1 // pred_fallthru
      _
    // Predicated region
    $region26: #{forward.1} parent=1 // pred_check
      _
    $region27: #{forward.1} parent=1 // pred_check_branch
      %65 = sbr.rel (0) target = $region29
    $region28: #{forward.1} parent=1 // pred_region
      %s67 = ssub.s32 1024, 1024
      %68 = vsyncadd [#allocation9], %s67
      %s69 = sshll.u32 [#allocation10], 4
      %s70 = int_to_ptr.vmem [resolvable:$true] %s69
      %75 = dma.hbm_to_vmem [thread:$0]  %s6, 1024, %s70, [#allocation9], 64, 64, 4
    $region29: #{forward.1} parent=1 // pred_fallthru
      _
    // Predicated region
    $region30: #{forward.1} parent=1 // pred_check
      _
    $region31: #{forward.1} parent=1 // pred_check_branch
      %77 = sbr.rel (0) target = $region33
    $region32: #{forward.1} parent=1 // pred_region
      %s79 = ssub.s32 16, 16
      %80 = vsyncadd [#allocation12], %s79
      %s82 = sshll.u32 [#allocation11], 4
      %s83 = int_to_ptr.vmem [resolvable:$true] %s82
      %85 = dma.hbm_to_vmem [thread:$0]  %s7, 16, %s83, [#allocation12]
    $region33: #{forward.1} parent=1 // pred_fallthru
      _
    // Predicated region
    $region34: #{forward.1} parent=1 // pred_check
      _
    $region35: #{forward.1} parent=1 // pred_check_branch
      %87 = sbr.rel (0) target = $region37
    $region36: #{forward.1} parent=1 // pred_region
      %88 = dma.done [#allocation3], 128
    $region37: #{forward.1} parent=1 // pred_fallthru
      _
    // Predicated region
    $region38: #{forward.1} parent=1 // pred_check
      _
    $region39: #{forward.1} parent=1 // pred_check_branch
      %90 = sbr.rel (0) target = $region41
    $region40: #{forward.1} parent=1 // pred_region
      %91 = dma.done [#allocation6], 128
    $region41: #{forward.1} parent=1 // pred_fallthru
      _
    // Predicated region
    $region42: #{forward.1} parent=1 // pred_check
      _
    $region43: #{forward.1} parent=1 // pred_check_branch
      %93 = sbr.rel (0) target = $region45
    $region44: #{forward.1} parent=1 // pred_region
      %94 = dma.done [#allocation6], 128
    $region45: #{forward.1} parent=1 // pred_fallthru
      _
    // Predicated region
    $region46: #{forward.1} parent=1 // pred_check
      _
    $region47: #{forward.1} parent=1 // pred_check_branch
      %96 = sbr.rel (0) target = $region49
    $region48: #{forward.1} parent=1 // pred_region
      %97 = dma.done [#allocation9], 10240
    $region49: #{forward.1} parent=1 // pred_fallthru
      _
    // Predicated region
    $region50: #{forward.1} parent=1 // pred_check
      _
    $region51: #{forward.1} parent=1 // pred_check_branch
      %99 = sbr.rel (0) target = $region53
    $region52: #{forward.1} parent=1 // pred_region
      %100 = dma.done [#allocation9], 1024
    $region53: #{forward.1} parent=1 // pred_fallthru
      _
    // Predicated region
    $region54: #{forward.1} parent=1 // pred_check
      _
    $region55: #{forward.1} parent=1 // pred_check_branch
      %102 = sbr.rel (0) target = $region57
    $region56: #{forward.1} parent=1 // pred_region
      %103 = dma.done [#allocation12], 16
    $region57: #{forward.1} parent=1 // pred_fallthru
      _
    %v105 = vld [vmem:[#allocation2] sm:$0xff]
    %v106 = vld [vmem:[%s1] sm:$0xff]
    %v107 = vadd.s32 %v106, 64
    %v108 = vld [vmem:[#allocation5] sm:$0xff]
    %v109 = vadd.s32 %v108, 80
    %v110 = vld [vmem:[#allocation7] sm:$0xff]
    %v111 = vadd.s32 %v110, 92
    %v112 = vlaneseq
    %v113 = vand.u32 %v112, 127
    %v114 = vadd.s32 %v113, 128
    %115 = vset.pattern.permute.xlu0 0
    %116 = vperm.xlu0 %115, %v105
    %v117 = vpop.permute.xlu0 %116
    %vm118 = vcmp.eq.s32.totalorder %v113, %v117
    %vm119 = vcmp.eq.s32.totalorder %v114, %v117
    %120 = vset.pattern.permute.xlu0 0
    %121 = vperm.xlu0 %120, %v107
    %v122 = vpop.permute.xlu0 %121
    %vm123 = vcmp.eq.s32.totalorder %v113, %v122
    %vm124 = vcmp.eq.s32.totalorder %v114, %v122
    %vm125 = vmor %vm118, %vm123
    %vm126 = vmor %vm119, %vm124
    %127 = vset.pattern.permute.xlu0 0
    %128 = vperm.xlu0 %127, %v109
    %v129 = vpop.permute.xlu0 %128
    %vm130 = vcmp.eq.s32.totalorder %v113, %v129
    %vm131 = vcmp.eq.s32.totalorder %v114, %v129
    %vm132 = vmor %vm125, %vm130
    %vm133 = vmor %vm126, %vm131
    %134 = vset.pattern.permute.xlu0 0
    %135 = vperm.xlu0 %134, %v111
    %v136 = vpop.permute.xlu0 %135
    %vm137 = vcmp.eq.s32.totalorder %v113, %v136
    %vm138 = vcmp.eq.s32.totalorder %v114, %v136
    %vm139 = vmor %vm132, %vm137
    %vm140 = vmor %vm133, %vm138
    %v141 = vsel %vm139, 1, 0
    %v142 = vsel %vm140, 1, 0
    %v143 = vcvt.s32.f32 %v141
    %v144 = vcvt.s32.f32 %v142
    %v145 = vpack.c.bf16 %v143, %v143
    %v146 = vpack.c.bf16 %v144, %v144
    %v147 = vld [vmem:[#allocation8] sm:$0xf]
    %v148 = vld [vmem:[#allocation8 + $0x4] sm:$0xf]
    %v149 = vld [vmem:[#allocation8 + $0x8] sm:$0xf]
    %v150 = vld [vmem:[#allocation8 + $0xc] sm:$0xf]
    %v151 = vld [vmem:[#allocation8 + $0x10] sm:$0xf]
    %v152 = vld [vmem:[#allocation8 + $0x14] sm:$0xf]
    %v153 = vld [vmem:[#allocation8 + $0x18] sm:$0xf]
    %v154 = vld [vmem:[#allocation8 + $0x1c] sm:$0xf]
    %v155 = vld [vmem:[#allocation8 + $0x20] sm:$0xf]
    %v156 = vld [vmem:[#allocation8 + $0x24] sm:$0xf]
    %v157 = vld [vmem:[#allocation8 + $0x28] sm:$0xf]
    %v158 = vld [vmem:[#allocation8 + $0x2c] sm:$0xf]
    %v159 = vld [vmem:[#allocation8 + $0x30] sm:$0xf]
    %v160 = vld [vmem:[#allocation8 + $0x34] sm:$0xf]
    %v161 = vld [vmem:[#allocation8 + $0x38] sm:$0xf]
    %v162 = vld [vmem:[#allocation8 + $0x3c] sm:$0xf]
    %v163 = vld [vmem:[#allocation8 + $0x40] sm:$0xf]
    %v164 = vld [vmem:[#allocation8 + $0x44] sm:$0xf]
    %v165 = vld [vmem:[#allocation8 + $0x48] sm:$0xf]
    %v166 = vld [vmem:[#allocation8 + $0x4c] sm:$0xf]
    %v167 = vld [vmem:[#allocation8 + $0x50] sm:$0xf]
    %v168 = vld [vmem:[#allocation8 + $0x54] sm:$0xf]
    %v169 = vld [vmem:[#allocation8 + $0x58] sm:$0xf]
    %v170 = vld [vmem:[#allocation8 + $0x5c] sm:$0xf]
    %v171 = vld [vmem:[#allocation8 + $0x60] sm:$0xf]
    %v172 = vld [vmem:[#allocation8 + $0x64] sm:$0xf]
    %v173 = vld [vmem:[#allocation8 + $0x68] sm:$0xf]
    %v174 = vld [vmem:[#allocation8 + $0x6c] sm:$0xf]
    %v175 = vld [vmem:[#allocation8 + $0x70] sm:$0xf]
    %v176 = vld [vmem:[#allocation8 + $0x74] sm:$0xf]
    %v177 = vld [vmem:[#allocation8 + $0x78] sm:$0xf]
    %v178 = vld [vmem:[#allocation8 + $0x7c] sm:$0xf]
    %179 = vset.pattern.permute.xlu0 1
    %180 = vperm.xlu0 %179, %v105
    %v181 = vpop.permute.xlu0 %180
    %vm182 = vcmp.eq.s32.totalorder %v113, %v181
    %vm183 = vcmp.eq.s32.totalorder %v114, %v181
    %184 = vset.pattern.permute.xlu0 1
    %185 = vperm.xlu0 %184, %v107
    %v186 = vpop.permute.xlu0 %185
    %vm187 = vcmp.eq.s32.totalorder %v113, %v186
    %vm188 = vcmp.eq.s32.totalorder %v114, %v186
    %vm189 = vmor %vm182, %vm187
    %vm190 = vmor %vm183, %vm188
    %191 = vset.pattern.permute.xlu0 1
    %192 = vperm.xlu0 %191, %v109
    %v193 = vpop.permute.xlu0 %192
    %vm194 = vcmp.eq.s32.totalorder %v113, %v193
    %vm195 = vcmp.eq.s32.totalorder %v114, %v193
    %vm196 = vmor %vm189, %vm194
    %vm197 = vmor %vm190, %vm195
    %198 = vset.pattern.permute.xlu0 1
    %199 = vperm.xlu0 %198, %v111
    %v200 = vpop.permute.xlu0 %199
    %vm201 = vcmp.eq.s32.totalorder %v113, %v200
    %vm202 = vcmp.eq.s32.totalorder %v114, %v200
    %vm203 = vmor %vm196, %vm201
    %vm204 = vmor %vm197, %vm202
    %v205 = vsel %vm203, 1, 0
    %v206 = vsel %vm204, 1, 0
    %v207 = vcvt.s32.f32 %v205
    %v208 = vcvt.s32.f32 %v206
    %v209 = vpack.c.bf16 %v207, %v207
    %v210 = vpack.c.bf16 %v208, %v208
    %s211 = scalar_lea.vmem [#allocation8], 128
    %v212 = vld [vmem:[%s211] sm:$0xf]
    %v213 = vld [vmem:[%s211 + $0x4] sm:$0xf]
    %v214 = vld [vmem:[%s211 + $0x8] sm:$0xf]
    %v215 = vld [vmem:[%s211 + $0xc] sm:$0xf]
    %v216 = vld [vmem:[%s211 + $0x10] sm:$0xf]
    %v217 = vld [vmem:[%s211 + $0x14] sm:$0xf]
    %v218 = vld [vmem:[%s211 + $0x18] sm:$0xf]
    %v219 = vld [vmem:[%s211 + $0x1c] sm:$0xf]
    %v220 = vld [vmem:[%s211 + $0x20] sm:$0xf]
    %v221 = vld [vmem:[%s211 + $0x24] sm:$0xf]
    %v222 = vld [vmem:[%s211 + $0x28] sm:$0xf]
    %v223 = vld [vmem:[%s211 + $0x2c] sm:$0xf]
    %v224 = vld [vmem:[%s211 + $0x30] sm:$0xf]
    %v225 = vld [vmem:[%s211 + $0x34] sm:$0xf]
    %v226 = vld [vmem:[%s211 + $0x38] sm:$0xf]
    %v227 = vld [vmem:[%s211 + $0x3c] sm:$0xf]
    %v228 = vld [vmem:[%s211 + $0x40] sm:$0xf]
    %v229 = vld [vmem:[%s211 + $0x44] sm:$0xf]
    %v230 = vld [vmem:[%s211 + $0x48] sm:$0xf]
    %v231 = vld [vmem:[%s211 + $0x4c] sm:$0xf]
    %v232 = vld [vmem:[%s211 + $0x50] sm:$0xf]
    %v233 = vld [vmem:[%s211 + $0x54] sm:$0xf]
    %v234 = vld [vmem:[%s211 + $0x58] sm:$0xf]
    %v235 = vld [vmem:[%s211 + $0x5c] sm:$0xf]
    %v236 = vld [vmem:[%s211 + $0x60] sm:$0xf]
    %v237 = vld [vmem:[%s211 + $0x64] sm:$0xf]
    %v238 = vld [vmem:[%s211 + $0x68] sm:$0xf]
    %v239 = vld [vmem:[%s211 + $0x6c] sm:$0xf]
    %v240 = vld [vmem:[%s211 + $0x70] sm:$0xf]
    %v241 = vld [vmem:[%s211 + $0x74] sm:$0xf]
    %v242 = vld [vmem:[%s211 + $0x78] sm:$0xf]
    %v243 = vld [vmem:[%s211 + $0x7c] sm:$0xf]
    %v276 = vunpack.c.l.b16 %v212
    %v277 = vunpack.c.l.b16 %v213
    %v278 = vunpack.c.l.b16 %v214
    %v279 = vunpack.c.l.b16 %v215
    %v280 = vunpack.c.l.b16 %v216
    %v281 = vunpack.c.l.b16 %v217
    %v282 = vunpack.c.l.b16 %v218
    %v283 = vunpack.c.l.b16 %v219
    %v284 = vunpack.c.l.b16 %v220
    %v285 = vunpack.c.l.b16 %v221
    %v286 = vunpack.c.l.b16 %v222
    %v287 = vunpack.c.l.b16 %v223
    %v288 = vunpack.c.l.b16 %v224
    %v289 = vunpack.c.l.b16 %v225
    %v290 = vunpack.c.l.b16 %v226
    %v291 = vunpack.c.l.b16 %v227
    %v292 = vunpack.c.l.b16 %v228
    %v293 = vunpack.c.l.b16 %v229
    %v294 = vunpack.c.l.b16 %v230
    %v295 = vunpack.c.l.b16 %v231
    %v296 = vunpack.c.l.b16 %v232
    %v297 = vunpack.c.l.b16 %v233
    %v298 = vunpack.c.l.b16 %v234
    %v299 = vunpack.c.l.b16 %v235
    %v300 = vunpack.c.l.b16 %v236
    %v301 = vunpack.c.l.b16 %v237
    %v302 = vunpack.c.l.b16 %v238
    %v303 = vunpack.c.l.b16 %v239
    %v304 = vunpack.c.l.b16 %v240
    %v305 = vunpack.c.l.b16 %v241
    %v306 = vunpack.c.l.b16 %v242
    %v307 = vunpack.c.l.b16 %v243
    %v308 = vpack.c.b16 %v277, %v276
    %v309 = vpack.c.b16 %v279, %v278
    %v310 = vpack.c.b16 %v281, %v280
    %v311 = vpack.c.b16 %v283, %v282
    %v312 = vpack.c.b16 %v285, %v284
    %v313 = vpack.c.b16 %v287, %v286
    %v314 = vpack.c.b16 %v289, %v288
    %v315 = vpack.c.b16 %v291, %v290
    %v316 = vpack.c.b16 %v293, %v292
    %v317 = vpack.c.b16 %v295, %v294
    %v318 = vpack.c.b16 %v297, %v296
    %v319 = vpack.c.b16 %v299, %v298
    %v320 = vpack.c.b16 %v301, %v300
    %v321 = vpack.c.b16 %v303, %v302
    %v322 = vpack.c.b16 %v305, %v304
    %v323 = vpack.c.b16 %v307, %v306
    %340 = vmatprep.subr.bf16.mxu0 0
    %341 = vmatpush1.bf16.msra.mxu0 %v315
    %342 = vmatprep.subr.bf16.mxu0 0
    %343 = vmatpush1.bf16.msra.mxu0 %v314
    %344 = vmatprep.subr.bf16.mxu0 0
    %345 = vmatpush1.bf16.msra.mxu0 %v313
    %346 = vmatprep.subr.bf16.mxu0 0
    %347 = vmatpush1.bf16.msra.mxu0 %v312
    %348 = vmatprep.subr.bf16.mxu0 0
    %349 = vmatpush1.bf16.msra.mxu0 %v311
    %350 = vmatprep.subr.bf16.mxu0 0
    %351 = vmatpush1.bf16.msra.mxu0 %v310
    %352 = vmatprep.subr.bf16.mxu0 0
    %353 = vmatpush1.bf16.msra.mxu0 %v309
    %354 = vmatprep.subr.bf16.mxu0 0
    %355 = vmatpush1.bf16.msra.mxu0 %v308
    %356 = vmatprep.subr.bf16.mxu0 0
    %357 = vmatpush2.bf16.msra.mxu0 %v323
    %358 = vmatprep.subr.bf16.mxu0 0
    %359 = vmatpush2.bf16.msra.mxu0 %v322
    %360 = vmatprep.subr.bf16.mxu0 0
    %361 = vmatpush2.bf16.msra.mxu0 %v321
    %362 = vmatprep.subr.bf16.mxu0 0
    %363 = vmatpush2.bf16.msra.mxu0 %v320
    %364 = vmatprep.subr.bf16.mxu0 0
    %365 = vmatpush2.bf16.msra.mxu0 %v319
    %366 = vmatprep.subr.bf16.mxu0 0
    %367 = vmatpush2.bf16.msra.mxu0 %v318
    %368 = vmatprep.subr.bf16.mxu0 0
    %369 = vmatpush2.bf16.msra.mxu0 %v317
    %370 = vmatprep.subr.bf16.mxu0 0
    %371 = vmatpush2.bf16.msra.mxu0 %v316
    %372 = vmatprep.mubr.bf16.mxu0 %v210
    %373 = vmatmul.mubr.bf16.gmra.mxu0 %v209
    %v374 = vpop.f32.mrf.mxu0
    %v375 = vadd.f32 0.0, %v374
    %v376 = vpop.f32.mrf.mxu0
    %v377 = vpop.f32.mrf.mxu0
    %v378 = vpop.f32.mrf.mxu0
    %379 = vdwg.mxu0
    %v412 = vunpack.c.l.b16 %v147
    %v413 = vunpack.c.l.b16 %v148
    %v414 = vunpack.c.l.b16 %v149
    %v415 = vunpack.c.l.b16 %v150
    %v416 = vunpack.c.l.b16 %v151
    %v417 = vunpack.c.l.b16 %v152
    %v418 = vunpack.c.l.b16 %v153
    %v419 = vunpack.c.l.b16 %v154
    %v420 = vunpack.c.l.b16 %v155
    %v421 = vunpack.c.l.b16 %v156
    %v422 = vunpack.c.l.b16 %v157
    %v423 = vunpack.c.l.b16 %v158
    %v424 = vunpack.c.l.b16 %v159
    %v425 = vunpack.c.l.b16 %v160
    %v426 = vunpack.c.l.b16 %v161
    %v427 = vunpack.c.l.b16 %v162
    %v428 = vunpack.c.l.b16 %v163
    %v429 = vunpack.c.l.b16 %v164
    %v430 = vunpack.c.l.b16 %v165
    %v431 = vunpack.c.l.b16 %v166
    %v432 = vunpack.c.l.b16 %v167
    %v433 = vunpack.c.l.b16 %v168
    %v434 = vunpack.c.l.b16 %v169
    %v435 = vunpack.c.l.b16 %v170
    %v436 = vunpack.c.l.b16 %v171
    %v437 = vunpack.c.l.b16 %v172
    %v438 = vunpack.c.l.b16 %v173
    %v439 = vunpack.c.l.b16 %v174
    %v440 = vunpack.c.l.b16 %v175
    %v441 = vunpack.c.l.b16 %v176
    %v442 = vunpack.c.l.b16 %v177
    %v443 = vunpack.c.l.b16 %v178
    %v444 = vpack.c.b16 %v413, %v412
    %v445 = vpack.c.b16 %v415, %v414
    %v446 = vpack.c.b16 %v417, %v416
    %v447 = vpack.c.b16 %v419, %v418
    %v448 = vpack.c.b16 %v421, %v420
    %v449 = vpack.c.b16 %v423, %v422
    %v450 = vpack.c.b16 %v425, %v424
    %v451 = vpack.c.b16 %v427, %v426
    %v452 = vpack.c.b16 %v429, %v428
    %v453 = vpack.c.b16 %v431, %v430
    %v454 = vpack.c.b16 %v433, %v432
    %v455 = vpack.c.b16 %v435, %v434
    %v456 = vpack.c.b16 %v437, %v436
    %v457 = vpack.c.b16 %v439, %v438
    %v458 = vpack.c.b16 %v441, %v440
    %v459 = vpack.c.b16 %v443, %v442
    %476 = vmatprep.subr.bf16.mxu0 0
    %477 = vmatpush1.bf16.msra.mxu0 %v451
    %478 = vmatprep.subr.bf16.mxu0 0
    %479 = vmatpush1.bf16.msra.mxu0 %v450
    %480 = vmatprep.subr.bf16.mxu0 0
    %481 = vmatpush1.bf16.msra.mxu0 %v449
    %482 = vmatprep.subr.bf16.mxu0 0
    %483 = vmatpush1.bf16.msra.mxu0 %v448
    %484 = vmatprep.subr.bf16.mxu0 0
    %485 = vmatpush1.bf16.msra.mxu0 %v447
    %486 = vmatprep.subr.bf16.mxu0 0
    %487 = vmatpush1.bf16.msra.mxu0 %v446
    %488 = vmatprep.subr.bf16.mxu0 0
    %489 = vmatpush1.bf16.msra.mxu0 %v445
    %490 = vmatprep.subr.bf16.mxu0 0
    %491 = vmatpush1.bf16.msra.mxu0 %v444
    %492 = vmatprep.subr.bf16.mxu0 0
    %493 = vmatpush2.bf16.msra.mxu0 %v459
    %494 = vmatprep.subr.bf16.mxu0 0
    %495 = vmatpush2.bf16.msra.mxu0 %v458
    %496 = vmatprep.subr.bf16.mxu0 0
    %497 = vmatpush2.bf16.msra.mxu0 %v457
    %498 = vmatprep.subr.bf16.mxu0 0
    %499 = vmatpush2.bf16.msra.mxu0 %v456
    %500 = vmatprep.subr.bf16.mxu0 0
    %501 = vmatpush2.bf16.msra.mxu0 %v455
    %502 = vmatprep.subr.bf16.mxu0 0
    %503 = vmatpush2.bf16.msra.mxu0 %v454
    %504 = vmatprep.subr.bf16.mxu0 0
    %505 = vmatpush2.bf16.msra.mxu0 %v453
    %506 = vmatprep.subr.bf16.mxu0 0
    %507 = vmatpush2.bf16.msra.mxu0 %v452
    %508 = vmatprep.mubr.bf16.mxu0 %v146
    %509 = vmatmul.mubr.bf16.gmra.mxu0 %v145
    %v510 = vpop.f32.mrf.mxu0
    %v511 = vadd.f32 %v375, %v510
    %v512 = vpop.f32.mrf.mxu0
    %v513 = vpop.f32.mrf.mxu0
    %v514 = vpop.f32.mrf.mxu0
    %515 = vdwg.mxu0
    %516 = vset.pattern.permute.xlu0 2
    %517 = vperm.xlu0 %516, %v105
    %v518 = vpop.permute.xlu0 %517
    %vm519 = vcmp.eq.s32.totalorder %v113, %v518
    %vm520 = vcmp.eq.s32.totalorder %v114, %v518
    %521 = vset.pattern.permute.xlu0 2
    %522 = vperm.xlu0 %521, %v107
    %v523 = vpop.permute.xlu0 %522
    %vm524 = vcmp.eq.s32.totalorder %v113, %v523
    %vm525 = vcmp.eq.s32.totalorder %v114, %v523
    %vm526 = vmor %vm519, %vm524
    %vm527 = vmor %vm520, %vm525
    %528 = vset.pattern.permute.xlu0 2
    %529 = vperm.xlu0 %528, %v109
    %v530 = vpop.permute.xlu0 %529
    %vm531 = vcmp.eq.s32.totalorder %v113, %v530
    %vm532 = vcmp.eq.s32.totalorder %v114, %v530
    %vm533 = vmor %vm526, %vm531
    %vm534 = vmor %vm527, %vm532
    %535 = vset.pattern.permute.xlu0 2
    %536 = vperm.xlu0 %535, %v111
    %v537 = vpop.permute.xlu0 %536
    %vm538 = vcmp.eq.s32.totalorder %v113, %v537
    %vm539 = vcmp.eq.s32.totalorder %v114, %v537
    %vm540 = vmor %vm533, %vm538
    %vm541 = vmor %vm534, %vm539
    %v542 = vsel %vm540, 1, 0
    %v543 = vsel %vm541, 1, 0
    %v544 = vcvt.s32.f32 %v542
    %v545 = vcvt.s32.f32 %v543
    %v546 = vpack.c.bf16 %v544, %v544
    %v547 = vpack.c.bf16 %v545, %v545
    %s548 = scalar_lea.vmem [#allocation8], 256
    %v549 = vld [vmem:[%s548] sm:$0xf]
    %v550 = vld [vmem:[%s548 + $0x4] sm:$0xf]
    %v551 = vld [vmem:[%s548 + $0x8] sm:$0xf]
    %v552 = vld [vmem:[%s548 + $0xc] sm:$0xf]
    %v553 = vld [vmem:[%s548 + $0x10] sm:$0xf]
    %v554 = vld [vmem:[%s548 + $0x14] sm:$0xf]
    %v555 = vld [vmem:[%s548 + $0x18] sm:$0xf]
    %v556 = vld [vmem:[%s548 + $0x1c] sm:$0xf]
    %v557 = vld [vmem:[%s548 + $0x20] sm:$0xf]
    %v558 = vld [vmem:[%s548 + $0x24] sm:$0xf]
    %v559 = vld [vmem:[%s548 + $0x28] sm:$0xf]
    %v560 = vld [vmem:[%s548 + $0x2c] sm:$0xf]
    %v561 = vld [vmem:[%s548 + $0x30] sm:$0xf]
    %v562 = vld [vmem:[%s548 + $0x34] sm:$0xf]
    %v563 = vld [vmem:[%s548 + $0x38] sm:$0xf]
    %v564 = vld [vmem:[%s548 + $0x3c] sm:$0xf]
    %v565 = vld [vmem:[%s548 + $0x40] sm:$0xf]
    %v566 = vld [vmem:[%s548 + $0x44] sm:$0xf]
    %v567 = vld [vmem:[%s548 + $0x48] sm:$0xf]
    %v568 = vld [vmem:[%s548 + $0x4c] sm:$0xf]
    %v569 = vld [vmem:[%s548 + $0x50] sm:$0xf]
    %v570 = vld [vmem:[%s548 + $0x54] sm:$0xf]
    %v571 = vld [vmem:[%s548 + $0x58] sm:$0xf]
    %v572 = vld [vmem:[%s548 + $0x5c] sm:$0xf]
    %v573 = vld [vmem:[%s548 + $0x60] sm:$0xf]
    %v574 = vld [vmem:[%s548 + $0x64] sm:$0xf]
    %v575 = vld [vmem:[%s548 + $0x68] sm:$0xf]
    %v576 = vld [vmem:[%s548 + $0x6c] sm:$0xf]
    %v577 = vld [vmem:[%s548 + $0x70] sm:$0xf]
    %v578 = vld [vmem:[%s548 + $0x74] sm:$0xf]
    %v579 = vld [vmem:[%s548 + $0x78] sm:$0xf]
    %v580 = vld [vmem:[%s548 + $0x7c] sm:$0xf]
    %v613 = vunpack.c.l.b16 %v549
    %v614 = vunpack.c.l.b16 %v550
    %v615 = vunpack.c.l.b16 %v551
    %v616 = vunpack.c.l.b16 %v552
    %v617 = vunpack.c.l.b16 %v553
    %v618 = vunpack.c.l.b16 %v554
    %v619 = vunpack.c.l.b16 %v555
    %v620 = vunpack.c.l.b16 %v556
    %v621 = vunpack.c.l.b16 %v557
    %v622 = vunpack.c.l.b16 %v558
    %v623 = vunpack.c.l.b16 %v559
    %v624 = vunpack.c.l.b16 %v560
    %v625 = vunpack.c.l.b16 %v561
    %v626 = vunpack.c.l.b16 %v562
    %v627 = vunpack.c.l.b16 %v563
    %v628 = vunpack.c.l.b16 %v564
    %v629 = vunpack.c.l.b16 %v565
    %v630 = vunpack.c.l.b16 %v566
    %v631 = vunpack.c.l.b16 %v567
    %v632 = vunpack.c.l.b16 %v568
    %v633 = vunpack.c.l.b16 %v569
    %v634 = vunpack.c.l.b16 %v570
    %v635 = vunpack.c.l.b16 %v571
    %v636 = vunpack.c.l.b16 %v572
    %v637 = vunpack.c.l.b16 %v573
    %v638 = vunpack.c.l.b16 %v574
    %v639 = vunpack.c.l.b16 %v575
    %v640 = vunpack.c.l.b16 %v576
    %v641 = vunpack.c.l.b16 %v577
    %v642 = vunpack.c.l.b16 %v578
    %v643 = vunpack.c.l.b16 %v579
    %v644 = vunpack.c.l.b16 %v580
    %v645 = vpack.c.b16 %v614, %v613
    %v646 = vpack.c.b16 %v616, %v615
    %v647 = vpack.c.b16 %v618, %v617
    %v648 = vpack.c.b16 %v620, %v619
    %v649 = vpack.c.b16 %v622, %v621
    %v650 = vpack.c.b16 %v624, %v623
    %v651 = vpack.c.b16 %v626, %v625
    %v652 = vpack.c.b16 %v628, %v627
    %v653 = vpack.c.b16 %v630, %v629
    %v654 = vpack.c.b16 %v632, %v631
    %v655 = vpack.c.b16 %v634, %v633
    %v656 = vpack.c.b16 %v636, %v635
    %v657 = vpack.c.b16 %v638, %v637
    %v658 = vpack.c.b16 %v640, %v639
    %v659 = vpack.c.b16 %v642, %v641
    %v660 = vpack.c.b16 %v644, %v643
    %677 = vmatprep.subr.bf16.mxu0 0
    %678 = vmatpush1.bf16.msra.mxu0 %v652
    %679 = vmatprep.subr.bf16.mxu0 0
    %680 = vmatpush1.bf16.msra.mxu0 %v651
    %681 = vmatprep.subr.bf16.mxu0 0
    %682 = vmatpush1.bf16.msra.mxu0 %v650
    %683 = vmatprep.subr.bf16.mxu0 0
    %684 = vmatpush1.bf16.msra.mxu0 %v649
    %685 = vmatprep.subr.bf16.mxu0 0
    %686 = vmatpush1.bf16.msra.mxu0 %v648
    %687 = vmatprep.subr.bf16.mxu0 0
    %688 = vmatpush1.bf16.msra.mxu0 %v647
    %689 = vmatprep.subr.bf16.mxu0 0
    %690 = vmatpush1.bf16.msra.mxu0 %v646
    %691 = vmatprep.subr.bf16.mxu0 0
    %692 = vmatpush1.bf16.msra.mxu0 %v645
    %693 = vmatprep.subr.bf16.mxu0 0
    %694 = vmatpush2.bf16.msra.mxu0 %v660
    %695 = vmatprep.subr.bf16.mxu0 0
    %696 = vmatpush2.bf16.msra.mxu0 %v659
    %697 = vmatprep.subr.bf16.mxu0 0
    %698 = vmatpush2.bf16.msra.mxu0 %v658
    %699 = vmatprep.subr.bf16.mxu0 0
    %700 = vmatpush2.bf16.msra.mxu0 %v657
    %701 = vmatprep.subr.bf16.mxu0 0
    %702 = vmatpush2.bf16.msra.mxu0 %v656
    %703 = vmatprep.subr.bf16.mxu0 0
    %704 = vmatpush2.bf16.msra.mxu0 %v655
    %705 = vmatprep.subr.bf16.mxu0 0
    %706 = vmatpush2.bf16.msra.mxu0 %v654
    %707 = vmatprep.subr.bf16.mxu0 0
    %708 = vmatpush2.bf16.msra.mxu0 %v653
    %709 = vmatprep.mubr.bf16.mxu0 %v547
    %710 = vmatmul.mubr.bf16.gmra.mxu0 %v546
    %v711 = vpop.f32.mrf.mxu0
    %v712 = vadd.f32 0.0, %v711
    %v713 = vpop.f32.mrf.mxu0
    %v714 = vpop.f32.mrf.mxu0
    %v715 = vpop.f32.mrf.mxu0
    %716 = vdwg.mxu0
    %v717 = vadd.f32 %v511, %v712
    %718 = vset.pattern.permute.xlu0 3
    %719 = vperm.xlu0 %718, %v105
    %v720 = vpop.permute.xlu0 %719
    %vm721 = vcmp.eq.s32.totalorder %v113, %v720
    %vm722 = vcmp.eq.s32.totalorder %v114, %v720
    %723 = vset.pattern.permute.xlu0 3
    %724 = vperm.xlu0 %723, %v107
    %v725 = vpop.permute.xlu0 %724
    %vm726 = vcmp.eq.s32.totalorder %v113, %v725
    %vm727 = vcmp.eq.s32.totalorder %v114, %v725
    %vm728 = vmor %vm721, %vm726
    %vm729 = vmor %vm722, %vm727
    %730 = vset.pattern.permute.xlu0 3
    %731 = vperm.xlu0 %730, %v109
    %v732 = vpop.permute.xlu0 %731
    %vm733 = vcmp.eq.s32.totalorder %v113, %v732
    %vm734 = vcmp.eq.s32.totalorder %v114, %v732
    %vm735 = vmor %vm728, %vm733
    %vm736 = vmor %vm729, %vm734
    %737 = vset.pattern.permute.xlu0 3
    %738 = vperm.xlu0 %737, %v111
    %v739 = vpop.permute.xlu0 %738
    %vm740 = vcmp.eq.s32.totalorder %v113, %v739
    %vm741 = vcmp.eq.s32.totalorder %v114, %v739
    %vm742 = vmor %vm735, %vm740
    %vm743 = vmor %vm736, %vm741
    %v744 = vsel %vm742, 1, 0
    %v745 = vsel %vm743, 1, 0
    %v746 = vcvt.s32.f32 %v744
    %v747 = vcvt.s32.f32 %v745
    %v748 = vpack.c.bf16 %v746, %v746
    %v749 = vpack.c.bf16 %v747, %v747
    %s750 = scalar_lea.vmem [#allocation8], 384
    %v751 = vld [vmem:[%s750] sm:$0xf]
    %v752 = vld [vmem:[%s750 + $0x4] sm:$0xf]
    %v753 = vld [vmem:[%s750 + $0x8] sm:$0xf]
    %v754 = vld [vmem:[%s750 + $0xc] sm:$0xf]
    %v755 = vld [vmem:[%s750 + $0x10] sm:$0xf]
    %v756 = vld [vmem:[%s750 + $0x14] sm:$0xf]
    %v757 = vld [vmem:[%s750 + $0x18] sm:$0xf]
    %v758 = vld [vmem:[%s750 + $0x1c] sm:$0xf]
    %v759 = vld [vmem:[%s750 + $0x20] sm:$0xf]
    %v760 = vld [vmem:[%s750 + $0x24] sm:$0xf]
    %v761 = vld [vmem:[%s750 + $0x28] sm:$0xf]
    %v762 = vld [vmem:[%s750 + $0x2c] sm:$0xf]
    %v763 = vld [vmem:[%s750 + $0x30] sm:$0xf]
    %v764 = vld [vmem:[%s750 + $0x34] sm:$0xf]
    %v765 = vld [vmem:[%s750 + $0x38] sm:$0xf]
    %v766 = vld [vmem:[%s750 + $0x3c] sm:$0xf]
    %v767 = vld [vmem:[%s750 + $0x40] sm:$0xf]
    %v768 = vld [vmem:[%s750 + $0x44] sm:$0xf]
    %v769 = vld [vmem:[%s750 + $0x48] sm:$0xf]
    %v770 = vld [vmem:[%s750 + $0x4c] sm:$0xf]
    %v771 = vld [vmem:[%s750 + $0x50] sm:$0xf]
    %v772 = vld [vmem:[%s750 + $0x54] sm:$0xf]
    %v773 = vld [vmem:[%s750 + $0x58] sm:$0xf]
    %v774 = vld [vmem:[%s750 + $0x5c] sm:$0xf]
    %v775 = vld [vmem:[%s750 + $0x60] sm:$0xf]
    %v776 = vld [vmem:[%s750 + $0x64] sm:$0xf]
    %v777 = vld [vmem:[%s750 + $0x68] sm:$0xf]
    %v778 = vld [vmem:[%s750 + $0x6c] sm:$0xf]
    %v779 = vld [vmem:[%s750 + $0x70] sm:$0xf]
    %v780 = vld [vmem:[%s750 + $0x74] sm:$0xf]
    %v781 = vld [vmem:[%s750 + $0x78] sm:$0xf]
    %v782 = vld [vmem:[%s750 + $0x7c] sm:$0xf]
    %v815 = vunpack.c.l.b16 %v751
    %v816 = vunpack.c.l.b16 %v752
    %v817 = vunpack.c.l.b16 %v753
    %v818 = vunpack.c.l.b16 %v754
    %v819 = vunpack.c.l.b16 %v755
    %v820 = vunpack.c.l.b16 %v756
    %v821 = vunpack.c.l.b16 %v757
    %v822 = vunpack.c.l.b16 %v758
    %v823 = vunpack.c.l.b16 %v759
    %v824 = vunpack.c.l.b16 %v760
    %v825 = vunpack.c.l.b16 %v761
    %v826 = vunpack.c.l.b16 %v762
    %v827 = vunpack.c.l.b16 %v763
    %v828 = vunpack.c.l.b16 %v764
    %v829 = vunpack.c.l.b16 %v765
    %v830 = vunpack.c.l.b16 %v766
    %v831 = vunpack.c.l.b16 %v767
    %v832 = vunpack.c.l.b16 %v768
    %v833 = vunpack.c.l.b16 %v769
    %v834 = vunpack.c.l.b16 %v770
    %v835 = vunpack.c.l.b16 %v771
    %v836 = vunpack.c.l.b16 %v772
    %v837 = vunpack.c.l.b16 %v773
    %v838 = vunpack.c.l.b16 %v774
    %v839 = vunpack.c.l.b16 %v775
    %v840 = vunpack.c.l.b16 %v776
    %v841 = vunpack.c.l.b16 %v777
    %v842 = vunpack.c.l.b16 %v778
    %v843 = vunpack.c.l.b16 %v779
    %v844 = vunpack.c.l.b16 %v780
    %v845 = vunpack.c.l.b16 %v781
    %v846 = vunpack.c.l.b16 %v782
    %v847 = vpack.c.b16 %v816, %v815
    %v848 = vpack.c.b16 %v818, %v817
    %v849 = vpack.c.b16 %v820, %v819
    %v850 = vpack.c.b16 %v822, %v821
    %v851 = vpack.c.b16 %v824, %v823
    %v852 = vpack.c.b16 %v826, %v825
    %v853 = vpack.c.b16 %v828, %v827
    %v854 = vpack.c.b16 %v830, %v829
    %v855 = vpack.c.b16 %v832, %v831
    %v856 = vpack.c.b16 %v834, %v833
    %v857 = vpack.c.b16 %v836, %v835
    %v858 = vpack.c.b16 %v838, %v837
    %v859 = vpack.c.b16 %v840, %v839
    %v860 = vpack.c.b16 %v842, %v841
    %v861 = vpack.c.b16 %v844, %v843
    %v862 = vpack.c.b16 %v846, %v845
    %879 = vmatprep.subr.bf16.mxu0 0
    %880 = vmatpush1.bf16.msra.mxu0 %v854
    %881 = vmatprep.subr.bf16.mxu0 0
    %882 = vmatpush1.bf16.msra.mxu0 %v853
    %883 = vmatprep.subr.bf16.mxu0 0
    %884 = vmatpush1.bf16.msra.mxu0 %v852
    %885 = vmatprep.subr.bf16.mxu0 0
    %886 = vmatpush1.bf16.msra.mxu0 %v851
    %887 = vmatprep.subr.bf16.mxu0 0
    %888 = vmatpush1.bf16.msra.mxu0 %v850
    %889 = vmatprep.subr.bf16.mxu0 0
    %890 = vmatpush1.bf16.msra.mxu0 %v849
    %891 = vmatprep.subr.bf16.mxu0 0
    %892 = vmatpush1.bf16.msra.mxu0 %v848
    %893 = vmatprep.subr.bf16.mxu0 0
    %894 = vmatpush1.bf16.msra.mxu0 %v847
    %895 = vmatprep.subr.bf16.mxu0 0
    %896 = vmatpush2.bf16.msra.mxu0 %v862
    %897 = vmatprep.subr.bf16.mxu0 0
    %898 = vmatpush2.bf16.msra.mxu0 %v861
    %899 = vmatprep.subr.bf16.mxu0 0
    %900 = vmatpush2.bf16.msra.mxu0 %v860
    %901 = vmatprep.subr.bf16.mxu0 0
    %902 = vmatpush2.bf16.msra.mxu0 %v859
    %903 = vmatprep.subr.bf16.mxu0 0
    %904 = vmatpush2.bf16.msra.mxu0 %v858
    %905 = vmatprep.subr.bf16.mxu0 0
    %906 = vmatpush2.bf16.msra.mxu0 %v857
    %907 = vmatprep.subr.bf16.mxu0 0
    %908 = vmatpush2.bf16.msra.mxu0 %v856
    %909 = vmatprep.subr.bf16.mxu0 0
    %910 = vmatpush2.bf16.msra.mxu0 %v855
    %911 = vmatprep.mubr.bf16.mxu0 %v749
    %912 = vmatmul.mubr.bf16.gmra.mxu0 %v748
    %v913 = vpop.f32.mrf.mxu0
    %v914 = vadd.f32 0.0, %v913
    %v915 = vpop.f32.mrf.mxu0
    %v916 = vpop.f32.mrf.mxu0
    %v917 = vpop.f32.mrf.mxu0
    %918 = vdwg.mxu0
    %v919 = vadd.f32 %v717, %v914
    %920 = vset.pattern.permute.xlu0 4
    %921 = vperm.xlu0 %920, %v105
    %v922 = vpop.permute.xlu0 %921
    %vm923 = vcmp.eq.s32.totalorder %v113, %v922
    %vm924 = vcmp.eq.s32.totalorder %v114, %v922
    %925 = vset.pattern.permute.xlu0 4
    %926 = vperm.xlu0 %925, %v107
    %v927 = vpop.permute.xlu0 %926
    %vm928 = vcmp.eq.s32.totalorder %v113, %v927
    %vm929 = vcmp.eq.s32.totalorder %v114, %v927
    %vm930 = vmor %vm923, %vm928
    %vm931 = vmor %vm924, %vm929
    %932 = vset.pattern.permute.xlu0 4
    %933 = vperm.xlu0 %932, %v109
    %v934 = vpop.permute.xlu0 %933
    %vm935 = vcmp.eq.s32.totalorder %v113, %v934
    %vm936 = vcmp.eq.s32.totalorder %v114, %v934
    %vm937 = vmor %vm930, %vm935
    %vm938 = vmor %vm931, %vm936
    %939 = vset.pattern.permute.xlu0 4
    %940 = vperm.xlu0 %939, %v111
    %v941 = vpop.permute.xlu0 %940
    %vm942 = vcmp.eq.s32.totalorder %v113, %v941
    %vm943 = vcmp.eq.s32.totalorder %v114, %v941
    %vm944 = vmor %vm937, %vm942
    %vm945 = vmor %vm938, %vm943
    %v946 = vsel %vm944, 1, 0
    %v947 = vsel %vm945, 1, 0
    %v948 = vcvt.s32.f32 %v946
    %v949 = vcvt.s32.f32 %v947
    %v950 = vpack.c.bf16 %v948, %v948
    %v951 = vpack.c.bf16 %v949, %v949
    %s952 = scalar_lea.vmem [#allocation8], 512
    %v953 = vld [vmem:[%s952] sm:$0xf]
    %v954 = vld [vmem:[%s952 + $0x4] sm:$0xf]
    %v955 = vld [vmem:[%s952 + $0x8] sm:$0xf]
    %v956 = vld [vmem:[%s952 + $0xc] sm:$0xf]
    %v957 = vld [vmem:[%s952 + $0x10] sm:$0xf]
    %v958 = vld [vmem:[%s952 + $0x14] sm:$0xf]
    %v959 = vld [vmem:[%s952 + $0x18] sm:$0xf]
    %v960 = vld [vmem:[%s952 + $0x1c] sm:$0xf]
    %v961 = vld [vmem:[%s952 + $0x20] sm:$0xf]
    %v962 = vld [vmem:[%s952 + $0x24] sm:$0xf]
    %v963 = vld [vmem:[%s952 + $0x28] sm:$0xf]
    %v964 = vld [vmem:[%s952 + $0x2c] sm:$0xf]
    %v965 = vld [vmem:[%s952 + $0x30] sm:$0xf]
    %v966 = vld [vmem:[%s952 + $0x34] sm:$0xf]
    %v967 = vld [vmem:[%s952 + $0x38] sm:$0xf]
    %v968 = vld [vmem:[%s952 + $0x3c] sm:$0xf]
    %v969 = vld [vmem:[%s952 + $0x40] sm:$0xf]
    %v970 = vld [vmem:[%s952 + $0x44] sm:$0xf]
    %v971 = vld [vmem:[%s952 + $0x48] sm:$0xf]
    %v972 = vld [vmem:[%s952 + $0x4c] sm:$0xf]
    %v973 = vld [vmem:[%s952 + $0x50] sm:$0xf]
    %v974 = vld [vmem:[%s952 + $0x54] sm:$0xf]
    %v975 = vld [vmem:[%s952 + $0x58] sm:$0xf]
    %v976 = vld [vmem:[%s952 + $0x5c] sm:$0xf]
    %v977 = vld [vmem:[%s952 + $0x60] sm:$0xf]
    %v978 = vld [vmem:[%s952 + $0x64] sm:$0xf]
    %v979 = vld [vmem:[%s952 + $0x68] sm:$0xf]
    %v980 = vld [vmem:[%s952 + $0x6c] sm:$0xf]
    %v981 = vld [vmem:[%s952 + $0x70] sm:$0xf]
    %v982 = vld [vmem:[%s952 + $0x74] sm:$0xf]
    %v983 = vld [vmem:[%s952 + $0x78] sm:$0xf]
    %v984 = vld [vmem:[%s952 + $0x7c] sm:$0xf]
    %v1017 = vunpack.c.l.b16 %v953
    %v1018 = vunpack.c.l.b16 %v954
    %v1019 = vunpack.c.l.b16 %v955
    %v1020 = vunpack.c.l.b16 %v956
    %v1021 = vunpack.c.l.b16 %v957
    %v1022 = vunpack.c.l.b16 %v958
    %v1023 = vunpack.c.l.b16 %v959
    %v1024 = vunpack.c.l.b16 %v960
    %v1025 = vunpack.c.l.b16 %v961
    %v1026 = vunpack.c.l.b16 %v962
    %v1027 = vunpack.c.l.b16 %v963
    %v1028 = vunpack.c.l.b16 %v964
    %v1029 = vunpack.c.l.b16 %v965
    %v1030 = vunpack.c.l.b16 %v966
    %v1031 = vunpack.c.l.b16 %v967
    %v1032 = vunpack.c.l.b16 %v968
    %v1033 = vunpack.c.l.b16 %v969
    %v1034 = vunpack.c.l.b16 %v970
    %v1035 = vunpack.c.l.b16 %v971
    %v1036 = vunpack.c.l.b16 %v972
    %v1037 = vunpack.c.l.b16 %v973
    %v1038 = vunpack.c.l.b16 %v974
    %v1039 = vunpack.c.l.b16 %v975
    %v1040 = vunpack.c.l.b16 %v976
    %v1041 = vunpack.c.l.b16 %v977
    %v1042 = vunpack.c.l.b16 %v978
    %v1043 = vunpack.c.l.b16 %v979
    %v1044 = vunpack.c.l.b16 %v980
    %v1045 = vunpack.c.l.b16 %v981
    %v1046 = vunpack.c.l.b16 %v982
    %v1047 = vunpack.c.l.b16 %v983
    %v1048 = vunpack.c.l.b16 %v984
    %v1049 = vpack.c.b16 %v1018, %v1017
    %v1050 = vpack.c.b16 %v1020, %v1019
    %v1051 = vpack.c.b16 %v1022, %v1021
    %v1052 = vpack.c.b16 %v1024, %v1023
    %v1053 = vpack.c.b16 %v1026, %v1025
    %v1054 = vpack.c.b16 %v1028, %v1027
    %v1055 = vpack.c.b16 %v1030, %v1029
    %v1056 = vpack.c.b16 %v1032, %v1031
    %v1057 = vpack.c.b16 %v1034, %v1033
    %v1058 = vpack.c.b16 %v1036, %v1035
    %v1059 = vpack.c.b16 %v1038, %v1037
    %v1060 = vpack.c.b16 %v1040, %v1039
    %v1061 = vpack.c.b16 %v1042, %v1041
    %v1062 = vpack.c.b16 %v1044, %v1043
    %v1063 = vpack.c.b16 %v1046, %v1045
    %v1064 = vpack.c.b16 %v1048, %v1047
    %1081 = vmatprep.subr.bf16.mxu0 0
    %1082 = vmatpush1.bf16.msra.mxu0 %v1056
    %1083 = vmatprep.subr.bf16.mxu0 0
    %1084 = vmatpush1.bf16.msra.mxu0 %v1055
    %1085 = vmatprep.subr.bf16.mxu0 0
    %1086 = vmatpush1.bf16.msra.mxu0 %v1054
    %1087 = vmatprep.subr.bf16.mxu0 0
    %1088 = vmatpush1.bf16.msra.mxu0 %v1053
    %1089 = vmatprep.subr.bf16.mxu0 0
    %1090 = vmatpush1.bf16.msra.mxu0 %v1052
    %1091 = vmatprep.subr.bf16.mxu0 0
    %1092 = vmatpush1.bf16.msra.mxu0 %v1051
    %1093 = vmatprep.subr.bf16.mxu0 0
    %1094 = vmatpush1.bf16.msra.mxu0 %v1050
    %1095 = vmatprep.subr.bf16.mxu0 0
    %1096 = vmatpush1.bf16.msra.mxu0 %v1049
    %1097 = vmatprep.subr.bf16.mxu0 0
    %1098 = vmatpush2.bf16.msra.mxu0 %v1064
    %1099 = vmatprep.subr.bf16.mxu0 0
    %1100 = vmatpush2.bf16.msra.mxu0 %v1063
    %1101 = vmatprep.subr.bf16.mxu0 0
    %1102 = vmatpush2.bf16.msra.mxu0 %v1062
    %1103 = vmatprep.subr.bf16.mxu0 0
    %1104 = vmatpush2.bf16.msra.mxu0 %v1061
    %1105 = vmatprep.subr.bf16.mxu0 0
    %1106 = vmatpush2.bf16.msra.mxu0 %v1060
    %1107 = vmatprep.subr.bf16.mxu0 0
    %1108 = vmatpush2.bf16.msra.mxu0 %v1059
    %1109 = vmatprep.subr.bf16.mxu0 0
    %1110 = vmatpush2.bf16.msra.mxu0 %v1058
    %1111 = vmatprep.subr.bf16.mxu0 0
    %1112 = vmatpush2.bf16.msra.mxu0 %v1057
    %1113 = vmatprep.mubr.bf16.mxu0 %v951
    %1114 = vmatmul.mubr.bf16.gmra.mxu0 %v950
    %v1115 = vpop.f32.mrf.mxu0
    %v1116 = vadd.f32 0.0, %v1115
    %v1117 = vpop.f32.mrf.mxu0
    %v1118 = vpop.f32.mrf.mxu0
    %v1119 = vpop.f32.mrf.mxu0
    %1120 = vdwg.mxu0
    %v1121 = vadd.f32 %v919, %v1116
    %v1122 = vld [vmem:[%s5] sm:$0x1]
    %v1124 = vlaneseq
    %v1125 = vshrl.u32 %v1124, 7
    %v1126 = vsub.s32 0, %v1125
    %v1127 = vrot.slane %v1122, %v1126
    %v1129 = vadd.f32 %v1121, %v1127
    %v1130 = vmax.f32 %v1129, 0.0
    %v1131 = vpack.c.bf16 %v1130, %v1130
    %v1132 = vld [vmem:[#allocation10] sm:$0xf]
    %v1133 = vld [vmem:[#allocation10 + $0x4] sm:$0xf]
    %v1134 = vld [vmem:[#allocation10 + $0x8] sm:$0xf]
    %v1135 = vld [vmem:[#allocation10 + $0xc] sm:$0xf]
    %v1136 = vld [vmem:[#allocation10 + $0x10] sm:$0xf]
    %v1137 = vld [vmem:[#allocation10 + $0x14] sm:$0xf]
    %v1138 = vld [vmem:[#allocation10 + $0x18] sm:$0xf]
    %v1139 = vld [vmem:[#allocation10 + $0x1c] sm:$0xf]
    %v1140 = vld [vmem:[#allocation10 + $0x20] sm:$0xf]
    %v1141 = vld [vmem:[#allocation10 + $0x24] sm:$0xf]
    %v1142 = vld [vmem:[#allocation10 + $0x28] sm:$0xf]
    %v1143 = vld [vmem:[#allocation10 + $0x2c] sm:$0xf]
    %v1144 = vld [vmem:[#allocation10 + $0x30] sm:$0xf]
    %v1145 = vld [vmem:[#allocation10 + $0x34] sm:$0xf]
    %v1146 = vld [vmem:[#allocation10 + $0x38] sm:$0xf]
    %v1147 = vld [vmem:[#allocation10 + $0x3c] sm:$0xf]
    %v1148 = vld [vmem:[#allocation11] sm:$0x1]
    %v1150 = vlaneseq
    %v1151 = vshrl.u32 %v1150, 7
    %v1152 = vsub.s32 0, %v1151
    %v1153 = vrot.slane %v1148, %v1152
    %v1171 = vunpack.c.l.b16 %v1132
    %v1172 = vunpack.c.l.b16 %v1133
    %v1173 = vunpack.c.l.b16 %v1134
    %v1174 = vunpack.c.l.b16 %v1135
    %v1175 = vunpack.c.l.b16 %v1136
    %v1176 = vunpack.c.l.b16 %v1137
    %v1177 = vunpack.c.l.b16 %v1138
    %v1178 = vunpack.c.l.b16 %v1139
    %v1179 = vunpack.c.l.b16 %v1140
    %v1180 = vunpack.c.l.b16 %v1141
    %v1181 = vunpack.c.l.b16 %v1142
    %v1182 = vunpack.c.l.b16 %v1143
    %v1183 = vunpack.c.l.b16 %v1144
    %v1184 = vunpack.c.l.b16 %v1145
    %v1185 = vunpack.c.l.b16 %v1146
    %v1186 = vunpack.c.l.b16 %v1147
    %v1187 = vpack.c.b16 %v1172, %v1171
    %v1188 = vpack.c.b16 %v1174, %v1173
    %v1189 = vpack.c.b16 %v1176, %v1175
    %v1190 = vpack.c.b16 %v1178, %v1177
    %v1191 = vpack.c.b16 %v1180, %v1179
    %v1192 = vpack.c.b16 %v1182, %v1181
    %v1193 = vpack.c.b16 %v1184, %v1183
    %v1194 = vpack.c.b16 %v1186, %v1185
    %1203 = vmatprep.subr.bf16.mxu0 0
    %1204 = vmatpush1.bf16.msra.mxu0 %v1194
    %1205 = vmatprep.subr.bf16.mxu0 0
    %1206 = vmatpush1.bf16.msra.mxu0 %v1193
    %1207 = vmatprep.subr.bf16.mxu0 0
    %1208 = vmatpush1.bf16.msra.mxu0 %v1192
    %1209 = vmatprep.subr.bf16.mxu0 0
    %1210 = vmatpush1.bf16.msra.mxu0 %v1191
    %1211 = vmatprep.subr.bf16.mxu0 0
    %1212 = vmatpush1.bf16.msra.mxu0 %v1190
    %1213 = vmatprep.subr.bf16.mxu0 0
    %1214 = vmatpush1.bf16.msra.mxu0 %v1189
    %1215 = vmatprep.subr.bf16.mxu0 0
    %1216 = vmatpush1.bf16.msra.mxu0 %v1188
    %1217 = vmatprep.subr.bf16.mxu0 0
    %1218 = vmatpush1.bf16.msra.mxu0 %v1187
    %1219 = vmatprep.subr.bf16.mxu0 0
    %1220 = vmatpush2.bf16.msra.mxu0 0
    %1221 = vmatprep.subr.bf16.mxu0 0
    %1222 = vmatpush2.bf16.msra.mxu0 0
    %1223 = vmatprep.subr.bf16.mxu0 0
    %1224 = vmatpush2.bf16.msra.mxu0 0
    %1225 = vmatprep.subr.bf16.mxu0 0
    %1226 = vmatpush2.bf16.msra.mxu0 0
    %1227 = vmatprep.subr.bf16.mxu0 0
    %1228 = vmatpush2.bf16.msra.mxu0 0
    %1229 = vmatprep.subr.bf16.mxu0 0
    %1230 = vmatpush2.bf16.msra.mxu0 0
    %1231 = vmatprep.subr.bf16.mxu0 0
    %1232 = vmatpush2.bf16.msra.mxu0 0
    %1233 = vmatprep.subr.bf16.mxu0 0
    %1234 = vmatpush2.bf16.msra.mxu0 0
    %1235 = vmatprep.mubr.bf16.mxu0 0
    %1236 = vmatmul.mubr.bf16.gmra.mxu0 %v1131
    %v1237 = vpop.f32.mrf.mxu0
    %v1238 = vadd.f32 %v1153, %v1237
    %v1239 = vpop.f32.mrf.mxu0
    %v1240 = vpop.f32.mrf.mxu0
    %v1241 = vpop.f32.mrf.mxu0
    %1242 = vdwg.mxu0
    %1243 = vst [vmem:[#allocation13] sm:$0xff] %v1238
    // Predicated region
    $region58: #{forward.1} parent=1 // pred_check
      _
    $region59: #{forward.1} parent=1 // pred_check_branch
      %1245 = sbr.rel (0) target = $region61
    $region60: #{forward.1} parent=1 // pred_region
      %s1247 = ssub.s32 128, 128
      %1248 = vsyncadd [#allocation4], %s1247
      %s1250 = sshll.u32 [#allocation13], 4
      %s1251 = int_to_ptr.vmem [resolvable:$true] %s1250
      %1253 = dma.vmem_to_hbm [thread:$0]  %s1251, 128, %s8, [#allocation4]
    $region61: #{forward.1} parent=1 // pred_fallthru
      _
    // Predicated region
    $region62: #{forward.1} parent=1 // pred_check
      _
    $region63: #{forward.1} parent=1 // pred_check_branch
      %1255 = sbr.rel (0) target = $region65
    $region64: #{forward.1} parent=1 // pred_region
      %1256 = dma.done [#allocation4], 128
    $region65: #{forward.1} parent=1 // pred_fallthru
      _
    %1257 = vsyncpa [#allocation3], 1
    %1258 = vsyncpa [#allocation6], 1
    %1259 = vsyncpa [#allocation9], 1
    %1260 = vsyncpa [#allocation12], 1
    %1261 = vsyncpa [#allocation4], 1

</llo_original>
